<compile_context>
chip_gen: v7x
topology: tpu7x:2x2x1
jax: 0.10.0
libtpu: 0.0.40
codegen_flags: <defaults>
</compile_context>

<pallas_src>
import jax
import jax.numpy as jnp
from jax.experimental import pallas as pl
from jax.experimental.pallas import tpu as pltpu


_NEG_SENTINEL = -1.0e9  # matches the PyTorch module's fill value


def _max_pool_kernel(x_ref, m_ref, o_ref, acc_ref):
    # x_ref:   (Bt, St, Ht) input dtype
    # m_ref:   (Bt, St, 1)  int8 0/1 mask (broadcast over the lane/H axis)
    # o_ref:   (Bt, Ht)     output tile (input dtype), lane-dense
    # acc_ref: (Bt, Ht)     float32 running max, resident across the s axis
    s = pl.program_id(2)

    @pl.when(s == 0)
    def _init():
        acc_ref[...] = jnp.full_like(acc_ref, _NEG_SENTINEL)

    x = x_ref[...]                                      # stay in input dtype
    valid = m_ref[...] != 0                             # (Bt, St, 1) bool
    neg = jnp.asarray(_NEG_SENTINEL, dtype=x.dtype)
    masked = jnp.where(valid, x, neg)                   # broadcast mask over H
    tile_max = jnp.max(masked, axis=1)                  # (Bt, Ht), input dtype
    acc_ref[...] = jnp.maximum(acc_ref[...], tile_max.astype(acc_ref.dtype))

    @pl.when(s == pl.num_programs(2) - 1)
    def _store():
        o_ref[...] = acc_ref[...].astype(o_ref.dtype)


def _round_up(x, m):
    return ((x + m - 1) // m) * m


def max_pooling(last_hidden_state, attention_mask, *,
                block_b=8, block_s=None, block_h=1024,
                vmem_limit_bytes=32 * 1024 * 1024):
    """last_hidden_state: [B, S, H]; attention_mask: [B, S] -> [B, H] (x.dtype)."""
    B, S, H = last_hidden_state.shape
    x = last_hidden_state
    # int8 mask: 0/1 exact, halves the lane-padded [B,S,1] DMA bytes vs bf16.
    mask = attention_mask.astype(jnp.int8)

    def pick(dim, target, align):
        # Full-extent blocks are always legal; otherwise use an aligned tile
        # and pad the array up to a multiple of it.
        if dim <= target:
            return dim, dim
        t = max(align, (target // align) * align)
        return t, _round_up(dim, t)

    bt, Bp = pick(B, block_b, 8)          # out block 2nd-minor: mult of 8 / full
    ht, Hp = pick(H, block_h, 128)        # lane dim: mult of 128 / full

    # v7x megacore: the two "parallel" grid axes must provide >= 2 tiles or the
    # whole kernel runs on one of the two TensorCores.  If they collapse to
    # 1x1, halve the H tile (128-aligned) provided the extra padding traffic
    # stays <= 1/8.  (B > 8 already yields >= 2 batch tiles.)
    if (Bp // bt) * (Hp // ht) < 2 and H >= 256:
        ht2 = _round_up(-(-H // 2), 128)
        Hp2 = _round_up(H, ht2)
        if ht2 < H and (Hp2 - H) * 8 <= Hp2:
            ht, Hp = ht2, Hp2

    # Sequence tile: 32-aligned (covers f32/bf16/int8 sublane packing); sized
    # so the x tile is ~8 MiB per pipeline buffer (grow st for narrow dtypes).
    align_s = 32
    if block_s is None:
        target_bytes = 8 * 1024 * 1024
        st_guess = max(align_s, target_bytes // (bt * ht * x.dtype.itemsize))
        block_s = max(align_s, (st_guess // align_s) * align_s)
    st, Sp = pick(S, block_s, align_s)

    if (Bp, Sp, Hp) != (B, S, H):
        # Padded tokens get mask==0 -> sentinel, so they never win the max;
        # padded B rows / H columns are sliced off after the call.
        x = jnp.pad(x, ((0, Bp - B), (0, Sp - S), (0, Hp - H)))
        mask = jnp.pad(mask, ((0, Bp - B), (0, Sp - S)))

    mask3 = mask.reshape(Bp, Sp, 1)

    grid = (Bp // bt, Hp // ht, Sp // st)

    out = pl.pallas_call(
        _max_pool_kernel,
        out_shape=jax.ShapeDtypeStruct((Bp, Hp), x.dtype),
        grid_spec=pltpu.PrefetchScalarGridSpec(
            num_scalar_prefetch=0,
            grid=grid,
            in_specs=[
                pl.BlockSpec((bt, st, ht), lambda b, h, s: (b, s, h)),
                # Mask block ignores h, so it is re-fetched (H/ht) times; the
                # int8 dtype + large ht keep that refetch traffic small.
                pl.BlockSpec((bt, st, 1), lambda b, h, s: (b, s, 0)),
            ],
            out_specs=pl.BlockSpec((bt, ht), lambda b, h, s: (b, h)),
            scratch_shapes=[pltpu.VMEM((bt, ht), jnp.float32)],
        ),
        compiler_params=pltpu.CompilerParams(
            dimension_semantics=("parallel", "parallel", "arbitrary"),
            # ~17 MiB footprint at defaults: fits the 32 MiB scoped limit on
            # all chips and stays well under v7x's 64 MiB physical VMEM.
            # (On v6e one could raise this to 64 MiB and double st/ht.)
            vmem_limit_bytes=vmem_limit_bytes,
        ),
    )(x, mask3)

    if (Bp, Hp) != (B, H):
        out = out[:B, :H]
    return out


def _reference(last_hidden_state, attention_mask):
    # Pure-JAX reference mirroring the PyTorch module.
    m = attention_mask[..., None].astype(jnp.float32)
    emb = jnp.where(m == 0.0, jnp.float32(_NEG_SENTINEL),
                    last_hidden_state.astype(jnp.float32))
    return jnp.max(emb, axis=1)


if __name__ == "__main__":
    key = jax.random.PRNGKey(0)
    k1, k2 = jax.random.split(key)

    # Small shapes consistent with the module: [B, S, H] + [B, S] mask.
    B, S, H = 2, 8, 32
    last_hidden_state = jax.random.normal(k1, (B, S, H), dtype=jnp.float32)
    lengths = jnp.array([5, 3], dtype=jnp.int32)
    attention_mask = (jnp.arange(S)[None, :] < lengths[:, None]).astype(jnp.int32)

    out = max_pooling(last_hidden_state, attention_mask)
    jax.block_until_ready(out)
    ref = _reference(last_hidden_state, attention_mask)
    assert out.shape == (B, H)
    assert jnp.allclose(out.astype(jnp.float32), ref, atol=1e-6), \
        "mismatch vs reference (small)"

    # Second check: small explicit tiles ONLY to exercise the multi-tile grid
    # + padding path in CI; production calls should use the defaults.
    B2, S2, H2 = 4, 200, 300
    x2 = jax.random.normal(k2, (B2, S2, H2), dtype=jnp.float32)
    lengths2 = jnp.array([200, 77, 1, 150], dtype=jnp.int32)
    mask2 = (jnp.arange(S2)[None, :] < lengths2[:, None]).astype(jnp.int32)
    out2 = max_pooling(x2, mask2, block_b=8, block_s=64, block_h=128)
    jax.block_until_ready(out2)
    ref2 = _reference(x2, mask2)
    assert out2.shape == (B2, H2)
    assert jnp.allclose(out2.astype(jnp.float32), ref2, atol=1e-6), \
        "mismatch vs reference (tiled)"

    print("KERNEL_OK")
</pallas_src>

<mosaic_0001>
module attributes {stable_mosaic.version = 11 : i64} {
  func.func @_max_pool_kernel(%arg0: i32, %arg1: i32, %arg2: i32, %arg3: memref<2x8x32xf32, #tpu.memory_space<vmem>>, %arg4: memref<2x8x1xi8, #tpu.memory_space<vmem>>, %arg5: memref<2x32xf32, #tpu.memory_space<vmem>>, %arg6: memref<2x32xf32, #tpu.memory_space<vmem>>) attributes {dimension_semantics = [#tpu.dimension_semantics<parallel>, #tpu.dimension_semantics<parallel>, #tpu.dimension_semantics<arbitrary>], iteration_bounds = array<i64: 1, 1, 1>, scalar_prefetch = 0 : i64, scratch_operands = 1 : i64, tpu.core_type = #tpu.core_type<tc>, window_params = [{transform_indices = @transform_0, window_bounds = array<i64: 2, 8, 32>}, {transform_indices = @transform_1, window_bounds = array<i64: 2, 8, 1>}, {transform_indices = @transform_2, window_bounds = array<i64: 2, 32>}]} {
    %c0_i32 = arith.constant 0 : i32
    %0 = arith.cmpi eq, %arg2, %c0_i32 : i32
    %1 = arith.extui %0 : i1 to i32
    %c0_i32_0 = arith.constant 0 : i32
    %2 = arith.cmpi ne, %1, %c0_i32_0 : i32
    scf.if %2 {
      %cst_13 = arith.constant -1.000000e+09 : f32
      %18 = vector.broadcast %cst_13 : f32 to vector<2x32xf32>
      %c0_14 = arith.constant 0 : index
      %c0_15 = arith.constant 0 : index
      %19 = vector.load %arg6[%c0_14, %c0_15] : memref<2x32xf32, #tpu.memory_space<vmem>>, vector<2x32xf32>
      tpu.vector_store %arg6[%c0_14, %c0_15], %18 {strides = array<i32>} : memref<2x32xf32, #tpu.memory_space<vmem>>, vector<2x32xf32>,
    } else {
    }
    %c0 = arith.constant 0 : index
    %c0_1 = arith.constant 0 : index
    %c0_2 = arith.constant 0 : index
    %3 = vector.load %arg3[%c0, %c0_1, %c0_2] : memref<2x8x32xf32, #tpu.memory_space<vmem>>, vector<2x8x32xf32>
    %c0_3 = arith.constant 0 : index
    %c0_4 = arith.constant 0 : index
    %c0_5 = arith.constant 0 : index
    %4 = vector.load %arg4[%c0_3, %c0_4, %c0_5] : memref<2x8x1xi8, #tpu.memory_space<vmem>>, vector<2x8x1xi8>
    %c0_i8 = arith.constant 0 : i8
    %5 = vector.broadcast %c0_i8 : i8 to vector<2x8x1xi8>
    %6 = arith.cmpi ne, %4, %5 : vector<2x8x1xi8>
    %cst = arith.constant -1.000000e+09 : f32
    %7 = vector.shape_cast %6 : vector<2x8x1xi1> to vector<2x8x1xi1>
    %8 = vector.broadcast %7 : vector<2x8x1xi1> to vector<2x8x32xi1>
    %9 = vector.broadcast %cst : f32 to vector<2x8x32xf32>
    %10 = arith.select %8, %3, %9 : vector<2x8x32xi1>, vector<2x8x32xf32>
    %cst_6 = arith.constant dense<0xFF800000> : vector<2x32xf32>
    %11 = vector.multi_reduction <maximumf>, %10, %cst_6 [1] : vector<2x8x32xf32> to vector<2x32xf32>
    %c0_7 = arith.constant 0 : index
    %c0_8 = arith.constant 0 : index
    %12 = vector.load %arg6[%c0_7, %c0_8] : memref<2x32xf32, #tpu.memory_space<vmem>>, vector<2x32xf32>
    %13 = arith.maximumf %12, %11 : vector<2x32xf32>
    %c0_9 = arith.constant 0 : index
    %c0_10 = arith.constant 0 : index
    %14 = vector.load %arg6[%c0_9, %c0_10] : memref<2x32xf32, #tpu.memory_space<vmem>>, vector<2x32xf32>
    tpu.vector_store %arg6[%c0_9, %c0_10], %13 {strides = array<i32>} : memref<2x32xf32, #tpu.memory_space<vmem>>, vector<2x32xf32>,
    %c0_i32_11 = arith.constant 0 : i32
    %15 = arith.cmpi eq, %arg2, %c0_i32_11 : i32
    %16 = arith.extui %15 : i1 to i32
    %c0_i32_12 = arith.constant 0 : i32
    %17 = arith.cmpi ne, %16, %c0_i32_12 : i32
    scf.if %17 {
      %c0_13 = arith.constant 0 : index
      %c0_14 = arith.constant 0 : index
      %18 = vector.load %arg6[%c0_13, %c0_14] : memref<2x32xf32, #tpu.memory_space<vmem>>, vector<2x32xf32>
      %c0_15 = arith.constant 0 : index
      %c0_16 = arith.constant 0 : index
      %19 = vector.load %arg5[%c0_15, %c0_16] : memref<2x32xf32, #tpu.memory_space<vmem>>, vector<2x32xf32>
      tpu.vector_store %arg5[%c0_15, %c0_16], %18 {strides = array<i32>} : memref<2x32xf32, #tpu.memory_space<vmem>>, vector<2x32xf32>,
    } else {
    }
    return
  }
  func.func @transform_0(%arg0: i32, %arg1: i32, %arg2: i32) -> (i32, i32, i32) {
    %c0_i32 = arith.constant 0 : i32
    return %arg0, %arg2, %arg1 : i32, i32, i32
  }
  func.func @transform_1(%arg0: i32, %arg1: i32, %arg2: i32) -> (i32, i32, i32) {
    %c0_i32 = arith.constant 0 : i32
    %c0_i32_0 = arith.constant 0 : i32
    return %arg0, %arg2, %c0_i32 : i32, i32, i32
  }
  func.func @transform_2(%arg0: i32, %arg1: i32, %arg2: i32) -> (i32, i32) {
    %c0_i32 = arith.constant 0 : i32
    return %arg0, %arg1 : i32, i32
  }
}

</mosaic_0001>

<llo_original>
// kernel: tpu_custom_call.1
$region0: #{tpu_custom_call.1}
  #allocation0 [shape = 'u32[]', space=smem, size = 0x4, offset = 0x4, fixed_abs, tag = 'smem constant byte address 0x4 - core index']
  #allocation1 [shape = 'u32[144,128]{1,0:T(1,128)}', space=vmem, size = 0x12000, scoped, tag = 'internal scratch']
  #allocation2 [shape = 'f32[2,32]{1,0:T(2,128)}', space=vmem, size = 0x400, scoped, tag = 'scratch operand']
  %s0 = inlined_call_operand.hbm [shape: f32[2,8,32], index: 0, kind: input, shape index: {}]
  %s1 = inlined_call_operand.vmem [shape: s8[2,8,1], index: 1, kind: input, shape index: {}]
  %s2 = inlined_call_operand.hbm [shape: f32[2,32], index: 2, kind: output, shape index: {}]
  %s3 = sld [smem:[#allocation0]]
  $region30: #{tpu_custom_call.1} parent=0
    _
  %s5 = ssub.s32 1, %s3
  %s6 = scalar_select 0, %s5, %s3
  $region1: #{tpu_custom_call.1} parent=0
    #allocation3 [shape = 'u8[8192]{0}', space=vmem, size = 0x2000, scoped, tag = 'input window, operand 0, single buffered']
    #allocation4 [shape = 's32[1]{0}', space=sflag, size = 0x4, scoped, tag = 'scoped memory for tpu_custom_call.1']
    #allocation5 [shape = 's32[1]{0}', space=sflag, size = 0x4, scoped, tag = 'scoped memory for tpu_custom_call.1']
    #allocation6 [shape = 'u8[1024]{0}', space=vmem, size = 0x400, scoped, tag = 'output window, operand 0, single buffered']
    %7 = vsyncpa [#allocation4], 0
    %8 = vsyncpa [#allocation5], 0
    // Predicated region
    $region2: #{tpu_custom_call.1} parent=1 // pred_check
      _
    $region3: #{tpu_custom_call.1} parent=1 // pred_check_branch
      %10 = sbr.rel (0) target = $region5
    $region4: #{tpu_custom_call.1} parent=1 // pred_region
      %s12 = ssub.s32 256, 256
      %13 = vsyncadd [#allocation4], %s12
      %s14 = sshll.u32 [#allocation3], 4
      %s15 = int_to_ptr.vmem [resolvable:$true] %s14
      %20 = dma.hbm_to_vmem [thread:$0]  %s0, 256, %s15, [#allocation4], 128, 128, 8
    $region5: #{tpu_custom_call.1} parent=1 // pred_fallthru
      _
    // Predicated region
    $region6: #{tpu_custom_call.1} parent=1 // pred_check
      _
    $region7: #{tpu_custom_call.1} parent=1 // pred_check_branch
      %22 = sbr.rel (0) target = $region9
    $region8: #{tpu_custom_call.1} parent=1 // pred_region
      _
    $region9: #{tpu_custom_call.1} parent=1 // pred_fallthru
      _
    // Predicated region
    $region10: #{tpu_custom_call.1} parent=1 // pred_check
      _
    $region11: #{tpu_custom_call.1} parent=1 // pred_check_branch
      %24 = sbr.rel (0) target = $region13
    $region12: #{tpu_custom_call.1} parent=1 // pred_region
      %25 = dma.done [#allocation4], 256
    $region13: #{tpu_custom_call.1} parent=1 // pred_fallthru
      _
    %p28 = scmp.eq.s32.totalorder 0, 0
    // Predicated region
    $region14: #{tpu_custom_call.1} parent=1 // pred_check
      %p29 = pneg %p28
    $region15: #{tpu_custom_call.1} parent=1 // pred_check_branch
      %31 = sbr.rel (%p29) target = $region17
    $region16: #{tpu_custom_call.1} parent=1 // pred_region
      %vm32 = vcmask 254976
      %33 = vst.msk [vmem:[#allocation2] sm:$0x3] %vm32, -1e+09
    $region17: #{tpu_custom_call.1} parent=1 // pred_fallthru
      _
    %v34 = vld [vmem:[#allocation3] sm:$0xff]
    %v35 = vld [vmem:[#allocation3 + $0x8] sm:$0xff]
    %v36 = vld [vmem:[%s1] sm:$0x3]
    %v37 = vld [vmem:[%s1 + $0x2] sm:$0x3]
    %vm38 = vnez %v36
    %vm39 = vnez %v37
    %v40 = vsel %vm38, 16843009, 0
    %v41 = vsel %vm39, 16843009, 0
    %v42 = vunpack.c.0.s8 %v40
    %v43 = vunpack.c.0.s8 %v41
    %vm44 = vcmp.ne.s32.totalorder %v42, 0
    %vm45 = vcmp.ne.s32.totalorder %v43, 0
    %v46 = vsel %vm44, 1, 0
    %v47 = vsel %vm45, 1, 0
    %48 = vset.pattern.permute.xlu0 0
    %49 = vperm.xlu0 %48, %v46
    %v50 = vpop.permute.xlu0 %49
    %51 = vset.pattern.permute.xlu0 0
    %52 = vperm.xlu0 %51, %v47
    %v53 = vpop.permute.xlu0 %52
    %vm54 = vcmp.eq.s32.totalorder %v50, 1
    %vm55 = vcmp.eq.s32.totalorder %v53, 1
    %v56 = vsel %vm54, %v34, -1e+09
    %v57 = vsel %vm55, %v35, -1e+09
    %vm58 = vcmask 261120
    %v59 = vsel %vm58, %v56, -inf
    %v60 = vrot.slane %v59, 4
    %v61 = vmax.f32 %v59, %v60
    %v62 = vrot.slane %v61, 2
    %v63 = vmax.f32 %v61, %v62
    %v64 = vrot.slane %v63, 1
    %v65 = vmax.f32 %v63, %v64
    %v66 = vsel %vm58, %v57, -inf
    %v67 = vrot.slane %v66, 4
    %v68 = vmax.f32 %v66, %v67
    %v69 = vrot.slane %v68, 2
    %v70 = vmax.f32 %v68, %v69
    %v71 = vrot.slane %v70, 1
    %v72 = vmax.f32 %v70, %v71
    %v73 = vld [vmem:[#allocation2] sm:$0x3]
    %vm76 = vcmask 1041409
    %v77 = vsel %vm76, %v72, %v65
    %v79 = vmax.f32 %v73, %v77
    %vm80 = vcmask 254976
    %81 = vst.msk [vmem:[#allocation2] sm:$0x3] %vm80, %v79
    // Predicated region
    $region18: #{tpu_custom_call.1} parent=1 // pred_check
      %p82 = pneg %p28
    $region19: #{tpu_custom_call.1} parent=1 // pred_check_branch
      %84 = sbr.rel (%p82) target = $region21
    $region20: #{tpu_custom_call.1} parent=1 // pred_region
      %v85 = vld [vmem:[#allocation2] sm:$0x3]
      %86 = vst.msk [vmem:[#allocation6] sm:$0x3] %vm80, %v85
    $region21: #{tpu_custom_call.1} parent=1 // pred_fallthru
      _
    // Predicated region
    $region22: #{tpu_custom_call.1} parent=1 // pred_check
      _
    $region23: #{tpu_custom_call.1} parent=1 // pred_check_branch
      %88 = sbr.rel (0) target = $region25
    $region24: #{tpu_custom_call.1} parent=1 // pred_region
      %s90 = ssub.s32 32, 32
      %91 = vsyncadd [#allocation5], %s90
      %s93 = sshll.u32 [#allocation6], 4
      %s94 = int_to_ptr.vmem [resolvable:$true] %s93
      %96 = dma.vmem_to_hbm [thread:$0]  %s94, 32, %s2, [#allocation5]
    $region25: #{tpu_custom_call.1} parent=1 // pred_fallthru
      _
    // Predicated region
    $region26: #{tpu_custom_call.1} parent=1 // pred_check
      _
    $region27: #{tpu_custom_call.1} parent=1 // pred_check_branch
      %98 = sbr.rel (0) target = $region29
    $region28: #{tpu_custom_call.1} parent=1 // pred_region
      %99 = dma.done [#allocation5], 32
    $region29: #{tpu_custom_call.1} parent=1 // pred_fallthru
      _
    %100 = vsyncpa [#allocation4], 1
    %101 = vsyncpa [#allocation5], 1

</llo_original>
